<compile_context>
chip_gen: v7x
topology: tpu7x:2x2x1
jax: 0.10.0
libtpu: 0.0.40
codegen_flags: <defaults>
</compile_context>

<pallas_src>
import math
import jax
import jax.numpy as jnp
from jax.experimental import pallas as pl
from jax.experimental.pallas import tpu as pltpu


def gcn_pool_kernel(a_ref, hw_ref, dinv_ref, pooled_ref):
    """Normalized GCN propagation + ReLU + node-sum pooling for Bb graphs.

    a_ref:      (Bb, N, N)    raw adjacency block (self-loops handled via +Y)
    hw_ref:     (Bb, N, Fo)   precomputed H @ W_gc
    dinv_ref:   (Bb, N, 1)    D^{-1/2} diagonal = rsqrt(colsum(A) + 1)
    pooled_ref: (Bb, 1, Fo)   sum over nodes of relu(D^-1/2 (A+I) D^-1/2 H W)
    """
    a = a_ref[...]
    hw = hw_ref[...]
    dinv = dinv_ref[...]

    # (D^-1/2 (A+I) D^-1/2) (H W) == dinv * (A @ (dinv*HW) + (dinv*HW))
    y = dinv * hw                                               # (Bb, N, Fo)
    z = jnp.einsum('bij,bjf->bif', a, y,
                   preferred_element_type=jnp.float32) + y      # (A + I) @ y
    gc = jnp.maximum(dinv * z, 0.0)                             # ReLU

    # Graph pooling: sum over node axis.
    pooled_ref[...] = jnp.sum(gc, axis=1, keepdims=True).astype(pooled_ref.dtype)


def _pick_block_batch(B, target=8):
    """Largest divisor of B that is <= target while keeping >= 2 grid steps."""
    divisors = [d for d in range(1, B + 1) if B % d == 0 and d <= target]
    two_step = [d for d in divisors if B // d >= 2]
    return max(two_step) if two_step else max(divisors)


def my_model_forward(A, H, w_gc, w_fc, b_fc):
    """A: (B, N, N), H: (B, N, F_in). Returns (B, 1)."""
    B, N, _ = A.shape
    F_in = H.shape[-1]
    F_out = w_gc.shape[-1]

    # Hoisted shared-weight GEMM: one MXU-friendly (B*N, F_in) @ (F_in, F_out).
    HW = (H.reshape(B * N, F_in) @ w_gc).reshape(B, N, F_out)

    # D^{-1/2} of (A + I): column sums of A plus 1, one batched XLA reduction.
    # Precondition (as in the original module): degrees must be > 0; with a
    # non-negative adjacency, colsum(A) + 1 >= 1 so rsqrt is always finite.
    dinv = jax.lax.rsqrt(jnp.sum(A, axis=1) + 1.0).reshape(B, N, 1)

    Bb = _pick_block_batch(B)
    grid = (B // Bb,)

    pooled = pl.pallas_call(
        gcn_pool_kernel,
        out_shape=jax.ShapeDtypeStruct((B, 1, F_out), jnp.float32),
        grid_spec=pltpu.PrefetchScalarGridSpec(
            num_scalar_prefetch=0,
            grid=grid,
            in_specs=[
                pl.BlockSpec((Bb, N, N), lambda g: (g, 0, 0)),       # A block
                pl.BlockSpec((Bb, N, F_out), lambda g: (g, 0, 0)),   # H @ W_gc block
                pl.BlockSpec((Bb, N, 1), lambda g: (g, 0, 0)),       # D^-1/2 block
            ],
            out_specs=pl.BlockSpec((Bb, 1, F_out), lambda g: (g, 0, 0)),
        ),
        compiler_params=pltpu.CompilerParams(
            dimension_semantics=("parallel",)),
    )(A, HW, dinv)

    pooled = pooled.reshape(B, F_out)
    # Tiny FC head (3 -> 1) stays in the wrapper per perf review.
    return pooled @ jnp.transpose(w_fc) + b_fc


def _reference(A, H, w_gc, w_fc, b_fc):
    """Pure-JAX reference mirroring the PyTorch forward (for sanity check)."""
    N = A.shape[1]
    A_tilde = A + jnp.eye(N, dtype=A.dtype)
    d = jnp.sum(A_tilde, axis=1)                # axis=0 sum of each A_tilde[i]
    dinv = d ** -0.5
    D = jax.vmap(jnp.diag)(dinv)
    S = D @ A_tilde @ D
    gc = jax.nn.relu(S @ H @ w_gc)              # (B, N, F_out)
    pooled = jnp.sum(gc, axis=-2)               # (B, F_out)
    return pooled @ w_fc.T + b_fc               # (B, 1)


if __name__ == "__main__":
    B, N, F_in, F_out = 2, 8, 5, 3

    key = jax.random.PRNGKey(0)
    k_a, k_h, k_w, k_fw, k_fb = jax.random.split(key, 5)

    # Symmetric non-negative adjacency so degrees are positive.
    A_raw = jax.random.uniform(k_a, (B, N, N), dtype=jnp.float32)
    A = (A_raw + jnp.swapaxes(A_raw, -1, -2)) * 0.5
    H = jax.random.normal(k_h, (B, N, F_in), dtype=jnp.float32)

    # Deterministic xavier-normal style init (shapes from the PyTorch module).
    std_gc = math.sqrt(2.0 / (F_in + F_out))
    w_gc = std_gc * jax.random.normal(k_w, (F_in, F_out), dtype=jnp.float32)   # gc1.weight
    std_fc = math.sqrt(2.0 / (F_out + 1))
    w_fc = std_fc * jax.random.normal(k_fw, (1, F_out), dtype=jnp.float32)     # fc1.weight
    b_fc = 0.01 * jax.random.normal(k_fb, (1,), dtype=jnp.float32)             # fc1.bias

    out = my_model_forward(A, H, w_gc, w_fc, b_fc)
    out = jax.block_until_ready(out)

    ref = _reference(A, H, w_gc, w_fc, b_fc)
    assert out.shape == (B, 1)
    assert jnp.allclose(out, ref, atol=1e-4, rtol=1e-4), (out, ref)

    print("KERNEL_OK")
</pallas_src>

<mosaic_0001>
module attributes {stable_mosaic.version = 11 : i64} {
  func.func @gcn_pool_kernel(%arg0: i32, %arg1: memref<1x8x8xf32, #tpu.memory_space<vmem>>, %arg2: memref<1x8x3xf32, #tpu.memory_space<vmem>>, %arg3: memref<1x8x1xf32, #tpu.memory_space<vmem>>, %arg4: memref<1x1x3xf32, #tpu.memory_space<vmem>>) attributes {dimension_semantics = [#tpu.dimension_semantics<parallel>], iteration_bounds = array<i64: 2>, scalar_prefetch = 0 : i64, scratch_operands = 0 : i64, tpu.core_type = #tpu.core_type<tc>, window_params = [{transform_indices = @transform_0, window_bounds = array<i64: 1, 8, 8>}, {transform_indices = @transform_1, window_bounds = array<i64: 1, 8, 3>}, {transform_indices = @transform_2, window_bounds = array<i64: 1, 8, 1>}, {transform_indices = @transform_3, window_bounds = array<i64: 1, 1, 3>}]} {
    %c0 = arith.constant 0 : index
    %c0_0 = arith.constant 0 : index
    %c0_1 = arith.constant 0 : index
    %0 = vector.load %arg1[%c0, %c0_0, %c0_1] : memref<1x8x8xf32, #tpu.memory_space<vmem>>, vector<1x8x8xf32>
    %c0_2 = arith.constant 0 : index
    %c0_3 = arith.constant 0 : index
    %c0_4 = arith.constant 0 : index
    %1 = vector.load %arg2[%c0_2, %c0_3, %c0_4] : memref<1x8x3xf32, #tpu.memory_space<vmem>>, vector<1x8x3xf32>
    %c0_5 = arith.constant 0 : index
    %c0_6 = arith.constant 0 : index
    %c0_7 = arith.constant 0 : index
    %2 = vector.load %arg3[%c0_5, %c0_6, %c0_7] : memref<1x8x1xf32, #tpu.memory_space<vmem>>, vector<1x8x1xf32>
    %3 = vector.broadcast %2 : vector<1x8x1xf32> to vector<1x8x3xf32>
    %4 = arith.mulf %3, %1 : vector<1x8x3xf32>
    "tpu.trace_start"() <{level = 10 : i32, message = "bij,bjf->bif"}> : () -> ()
    %cst = arith.constant dense<0.000000e+00> : vector<1x8x3xf32>
    %5 = tpu.matmul %0, %4, %cst {dimension_numbers = #tpu.dot_dimension_numbers<[2], [1], [1], [2], [0, 0, 0, 1, 1, 2], [0], [0]>} : vector<1x8x8xf32>, vector<1x8x3xf32>, vector<1x8x3xf32> -> vector<1x8x3xf32>
    "tpu.trace_stop"() : () -> ()
    %6 = arith.addf %5, %4 : vector<1x8x3xf32>
    %7 = vector.broadcast %2 : vector<1x8x1xf32> to vector<1x8x3xf32>
    %8 = arith.mulf %7, %6 : vector<1x8x3xf32>
    %cst_8 = arith.constant 0.000000e+00 : f32
    %9 = vector.broadcast %cst_8 : f32 to vector<1x8x3xf32>
    %10 = arith.maximumf %8, %9 : vector<1x8x3xf32>
    %cst_9 = arith.constant dense<0.000000e+00> : vector<1x3xf32>
    %11 = vector.multi_reduction <add>, %10, %cst_9 [1] : vector<1x8x3xf32> to vector<1x3xf32>
    %12 = vector.shape_cast %11 : vector<1x3xf32> to vector<1x1x3xf32>
    %c0_10 = arith.constant 0 : index
    %c0_11 = arith.constant 0 : index
    %c0_12 = arith.constant 0 : index
    %13 = vector.load %arg4[%c0_10, %c0_11, %c0_12] : memref<1x1x3xf32, #tpu.memory_space<vmem>>, vector<1x1x3xf32>
    tpu.vector_store %arg4[%c0_10, %c0_11, %c0_12], %12 {strides = array<i32>} : memref<1x1x3xf32, #tpu.memory_space<vmem>>, vector<1x1x3xf32>,
    return
  }
  func.func @transform_0(%arg0: i32) -> (i32, i32, i32) {
    %c0_i32 = arith.constant 0 : i32
    %c0_i32_0 = arith.constant 0 : i32
    %c0_i32_1 = arith.constant 0 : i32
    return %arg0, %c0_i32, %c0_i32_0 : i32, i32, i32
  }
  func.func @transform_1(%arg0: i32) -> (i32, i32, i32) {
    %c0_i32 = arith.constant 0 : i32
    %c0_i32_0 = arith.constant 0 : i32
    %c0_i32_1 = arith.constant 0 : i32
    return %arg0, %c0_i32, %c0_i32_0 : i32, i32, i32
  }
  func.func @transform_2(%arg0: i32) -> (i32, i32, i32) {
    %c0_i32 = arith.constant 0 : i32
    %c0_i32_0 = arith.constant 0 : i32
    %c0_i32_1 = arith.constant 0 : i32
    return %arg0, %c0_i32, %c0_i32_0 : i32, i32, i32
  }
  func.func @transform_3(%arg0: i32) -> (i32, i32, i32) {
    %c0_i32 = arith.constant 0 : i32
    %c0_i32_0 = arith.constant 0 : i32
    %c0_i32_1 = arith.constant 0 : i32
    return %arg0, %c0_i32, %c0_i32_0 : i32, i32, i32
  }
}

</mosaic_0001>

<llo_original>
// kernel: tpu_custom_call.1
$region0: #{tpu_custom_call.1}
  #allocation0 [shape = 'u32[]', space=smem, size = 0x4, offset = 0x4, fixed_abs, tag = 'smem constant byte address 0x4 - core index']
  #allocation1 [shape = 'u32[144,128]{1,0:T(1,128)}', space=vmem, size = 0x12000, scoped, tag = 'internal scratch']
  %s0 = inlined_call_operand.vmem [shape: f32[2,8,8], index: 0, kind: input, shape index: {}]
  %s1 = inlined_call_operand.vmem [shape: f32[2,8,3], index: 1, kind: input, shape index: {}]
  %s2 = inlined_call_operand.vmem [shape: f32[2,8,1], index: 2, kind: input, shape index: {}]
  %s3 = inlined_call_operand.hbm [shape: f32[2,1,3], index: 3, kind: output, shape index: {}]
  %s4 = sld [smem:[#allocation0]]
  $region45: #{tpu_custom_call.1} parent=0
    _
  %s6 = ssub.s32 1, %s4
  %s7 = scalar_select 0, %s6, %s4
  $region1: #{tpu_custom_call.1} parent=0
    #allocation2 [shape = 'u8[1024]{0}', space=vmem, size = 0x400, scoped, tag = 'output window, operand 0']
    #allocation3 [shape = 's32[2]{0}', space=sflag, size = 0x8, scoped, tag = 'scoped memory for tpu_custom_call.1']
    %8 = vsyncpa [#allocation3], 0
    %s9 = scalar_lea.sflag [#allocation3], 1
    %10 = vsyncpa %s9, 0
    loop: start=0, step=1, limit=4
    $region2: #{tpu_custom_call.1} parent=1 // loop_pre_header
      _
    $region3: #{tpu_custom_call.1} parent=1 // loop_header
      %s12 = sphi 0, %s16
      %p13 = scmp.ge.s32.totalorder %s12, 4
      %s22 = sphi 0, %s24
      %s25 = sphi 0, %s22
      %s26 = sphi 0, %s25
      %s42 = sphi 0, %s26
      %s48 = sphi 0, %s50
      %s51 = sphi 0, %s48
      %s52 = sphi 0, %s51
      %s68 = sphi 0, %s52
      %s74 = sphi 0, %s76
      %s77 = sphi 0, %s74
      %s78 = sphi 0, %s77
      %s94 = sphi 0, %s78
      %s100 = sphi 0, %s102
      %s103 = sphi 0, %s100
      %s104 = sphi 0, %s103
      %s120 = sphi 0, %s104
    $region4: #{tpu_custom_call.1} parent=1 // loop_header_branch
      %15 = sbr.rel (%p13) target = $region8
    $region5: #{tpu_custom_call.1} parent=1 // loop_body
      %s17 = ssub.s32 %s12, 1
      %s18 = ssub.s32 %s12, 2
      %s19 = sadd.s32 %s12, 1
      %s20 = ssub.s32 %s12, %s19
      %p21 = scmp.eq.s32.totalorder %s20, 0
      %s23 = sadd.s32 %s22, 1
      %s24 = scalar_select %p21, %s22, %s23
      %p27 = pneg %p21
      %p28 = scmp.eq.s32.totalorder %s12, 1
      %p29 = por %p27, %p28
      %p30 = scmp.ne.s32.totalorder %s22, %s25
      %p31 = scmp.eq.s32.totalorder %s12, 0
      %p32 = por %p30, %p31
      %p33 = scmp.ne.s32.totalorder %s22, %s25
      %p34 = scmp.eq.s32.totalorder %s17, 1
      %p35 = por %p33, %p34
      %p36 = scmp.ne.s32.totalorder %s25, %s26
      %p37 = scmp.eq.s32.totalorder %s17, 0
      %p38 = por %p36, %p37
      %p39 = scmp.ne.s32.totalorder %s25, %s26
      %p40 = scmp.eq.s32.totalorder %s18, 1
      %p41 = por %p39, %p40
      %p43 = scmp.ne.s32.totalorder %s26, %s42
      %p44 = scmp.eq.s32.totalorder %s18, 0
      %p45 = por %p43, %p44
      %s46 = ssub.s32 %s12, %s19
      %p47 = scmp.eq.s32.totalorder %s46, 0
      %s49 = sadd.s32 %s48, 1
      %s50 = scalar_select %p47, %s48, %s49
      %p53 = pneg %p47
      %p54 = scmp.eq.s32.totalorder %s12, 1
      %p55 = por %p53, %p54
      %p56 = scmp.ne.s32.totalorder %s48, %s51
      %p57 = scmp.eq.s32.totalorder %s12, 0
      %p58 = por %p56, %p57
      %p59 = scmp.ne.s32.totalorder %s48, %s51
      %p60 = scmp.eq.s32.totalorder %s17, 1
      %p61 = por %p59, %p60
      %p62 = scmp.ne.s32.totalorder %s51, %s52
      %p63 = scmp.eq.s32.totalorder %s17, 0
      %p64 = por %p62, %p63
      %p65 = scmp.ne.s32.totalorder %s51, %s52
      %p66 = scmp.eq.s32.totalorder %s18, 1
      %p67 = por %p65, %p66
      %p69 = scmp.ne.s32.totalorder %s52, %s68
      %p70 = scmp.eq.s32.totalorder %s18, 0
      %p71 = por %p69, %p70
      %s72 = ssub.s32 %s12, %s19
      %p73 = scmp.eq.s32.totalorder %s72, 0
      %s75 = sadd.s32 %s74, 1
      %s76 = scalar_select %p73, %s74, %s75
      %p79 = pneg %p73
      %p80 = scmp.eq.s32.totalorder %s12, 1
      %p81 = por %p79, %p80
      %p82 = scmp.ne.s32.totalorder %s74, %s77
      %p83 = scmp.eq.s32.totalorder %s12, 0
      %p84 = por %p82, %p83
      %p85 = scmp.ne.s32.totalorder %s74, %s77
      %p86 = scmp.eq.s32.totalorder %s17, 1
      %p87 = por %p85, %p86
      %p88 = scmp.ne.s32.totalorder %s77, %s78
      %p89 = scmp.eq.s32.totalorder %s17, 0
      %p90 = por %p88, %p89
      %p91 = scmp.ne.s32.totalorder %s77, %s78
      %p92 = scmp.eq.s32.totalorder %s18, 1
      %p93 = por %p91, %p92
      %p95 = scmp.ne.s32.totalorder %s78, %s94
      %p96 = scmp.eq.s32.totalorder %s18, 0
      %p97 = por %p95, %p96
      %s98 = ssub.s32 %s12, %s19
      %p99 = scmp.eq.s32.totalorder %s98, 0
      %s101 = sadd.s32 %s100, 1
      %s102 = scalar_select %p99, %s100, %s101
      %p105 = pneg %p99
      %p106 = scmp.eq.s32.totalorder %s12, 1
      %p107 = por %p105, %p106
      %p108 = scmp.ne.s32.totalorder %s100, %s103
      %p109 = scmp.eq.s32.totalorder %s12, 0
      %p110 = por %p108, %p109
      %p111 = scmp.ne.s32.totalorder %s100, %s103
      %p112 = scmp.eq.s32.totalorder %s17, 1
      %p113 = por %p111, %p112
      %p114 = scmp.ne.s32.totalorder %s103, %s104
      %p115 = scmp.eq.s32.totalorder %s17, 0
      %p116 = por %p114, %p115
      %p117 = scmp.ne.s32.totalorder %s103, %s104
      %p118 = scmp.eq.s32.totalorder %s18, 1
      %p119 = por %p117, %p118
      %p121 = scmp.ne.s32.totalorder %s104, %s120
      %p122 = scmp.eq.s32.totalorder %s18, 0
      %p123 = por %p121, %p122
      %p124 = scmp.le.s32.totalorder 1, %s12
      %p125 = scmp.lt.s32.totalorder %s12, 3
      %p126 = pnand %p124, %p125
      %p127 = pneg %p126
      // Predicated region
      $region9: #{tpu_custom_call.1} parent=5 // pred_check
        _
      $region10: #{tpu_custom_call.1} parent=5 // pred_check_branch
        %129 = sbr.rel (%p126) target = $region12
      $region11: #{tpu_custom_call.1} parent=5 // pred_region
        %s130 = ssub.s32 %s12, 1
      $region12: #{tpu_custom_call.1} parent=5 // pred_fallthru
        _
      %p131 = scmp.lt.s32.totalorder %s12, 2
      // Predicated region
      $region13: #{tpu_custom_call.1} parent=5 // pred_check
        %p132 = pneg %p131
      $region14: #{tpu_custom_call.1} parent=5 // pred_check_branch
        %134 = sbr.rel (%p132) target = $region16
      $region15: #{tpu_custom_call.1} parent=5 // pred_region
        // Predicated region
        $region17: #{tpu_custom_call.1} parent=15 // pred_check
          %p135 = pneg %p32
        $region18: #{tpu_custom_call.1} parent=15 // pred_check_branch
          %137 = sbr.rel (%p135) target = $region20
        $region19: #{tpu_custom_call.1} parent=15 // pred_region
          %p138 = scmp.lt.s32.totalorder %s12, 1
          %s139 = scalar_select %p138, %s12, 1
          %s140 = smul.addr %s139, 8
          %s141 = scalar_lea.vmem %s0, %s140
        $region20: #{tpu_custom_call.1} parent=15 // pred_fallthru
          _
        // Predicated region
        $region21: #{tpu_custom_call.1} parent=15 // pred_check
          %p142 = pneg %p58
        $region22: #{tpu_custom_call.1} parent=15 // pred_check_branch
          %144 = sbr.rel (%p142) target = $region24
        $region23: #{tpu_custom_call.1} parent=15 // pred_region
          %p145 = scmp.lt.s32.totalorder %s12, 1
          %s146 = scalar_select %p145, %s12, 1
          %s147 = smul.addr %s146, 8
          %s148 = scalar_lea.vmem %s1, %s147
        $region24: #{tpu_custom_call.1} parent=15 // pred_fallthru
          _
        // Predicated region
        $region25: #{tpu_custom_call.1} parent=15 // pred_check
          %p149 = pneg %p84
        $region26: #{tpu_custom_call.1} parent=15 // pred_check_branch
          %151 = sbr.rel (%p149) target = $region28
        $region27: #{tpu_custom_call.1} parent=15 // pred_region
          %p152 = scmp.lt.s32.totalorder %s12, 1
          %s153 = scalar_select %p152, %s12, 1
          %s154 = smul.addr %s153, 8
          %s155 = scalar_lea.vmem %s2, %s154
        $region28: #{tpu_custom_call.1} parent=15 // pred_fallthru
          _
      $region16: #{tpu_custom_call.1} parent=5 // pred_fallthru
        _
      %p156 = scmp.le.s32.totalorder 1, %s12
      %p157 = scmp.lt.s32.totalorder %s12, 3
      %p158 = pnand %p156, %p157
      %p159 = pneg %p158
      // Predicated region
      $region29: #{tpu_custom_call.1} parent=5 // pred_check
        _
      $region30: #{tpu_custom_call.1} parent=5 // pred_check_branch
        %161 = sbr.rel (%p158) target = $region32
      $region31: #{tpu_custom_call.1} parent=5 // pred_region
        %s162 = ssub.s32 %s12, 1
        %p163 = scmp.lt.s32.totalorder %s17, 1
        %s164 = scalar_select %p163, %s17, 1
        %s165 = smul.addr %s164, 8
        %s166 = scalar_lea.vmem %s0, %s165
        %p167 = pneg %p38
        %p168 = pneg %p35
        %p169 = scmp.lt.s32.totalorder %s17, 1
        %s170 = scalar_select %p169, %s17, 1
        %s171 = smul.addr %s170, 8
        %s172 = scalar_lea.vmem %s1, %s171
        %p173 = pneg %p64
        %p174 = pneg %p61
        %p175 = scmp.lt.s32.totalorder %s17, 1
        %s176 = scalar_select %p175, %s17, 1
        %s177 = smul.addr %s176, 8
        %s178 = scalar_lea.vmem %s2, %s177
        %p179 = pneg %p90
        %p180 = pneg %p87
        %p181 = pneg %p116
        %p182 = pneg %p113
        %s183 = sand.u32 %s103, 1
        %s184 = scalar_lea.sflag [#allocation3], %s183
        %s185 = sand.u32 %s103, 1
        %s186 = scalar_lea.vmem [#allocation2], %s185
        %p187 = scmp.lt.s32.totalorder %s17, 1
        %s188 = scalar_select %p187, %s17, 1
        %s189 = smul.addr %s188, 8
        %s190 = scalar_lea.vmem %s0, %s189
        %p191 = scmp.lt.s32.totalorder %s17, 1
        %s192 = scalar_select %p191, %s17, 1
        %s193 = smul.addr %s192, 8
        %s194 = scalar_lea.vmem %s1, %s193
        %p195 = scmp.lt.s32.totalorder %s17, 1
        %s196 = scalar_select %p195, %s17, 1
        %s197 = smul.addr %s196, 8
        %s198 = scalar_lea.vmem %s2, %s197
        %v199 = vld [vmem:[%s190] sm:$0xff]
        %v200 = vld [vmem:[%s194] sm:$0xff]
        %v201 = vld [vmem:[%s198] sm:$0xff]
        %203 = vset.pattern.permute.xlu0 0
        %204 = vperm.xlu0 %203, %v201
        %v205 = vpop.permute.xlu0 %204
        %v207 = vmul.f32 %v205, %v200
        %vm208 = vcmask 64512
        %v210 = vsel %vm208, %v199, 0
        %212 = vmatprep.subr.mxu0 0.0
        %213 = vmatpush1.msra.mxu0 %v207
        %214 = vmatprep.subr.mxu0 0.0
        %215 = vmatpush1.msra.mxu0 0.0
        %216 = vmatprep.subr.mxu0 0.0
        %217 = vmatpush1.msra.mxu0 0.0
        %218 = vmatprep.subr.mxu0 0.0
        %219 = vmatpush1.msra.mxu0 0.0
        %220 = vmatprep.subr.mxu0 0.0
        %221 = vmatpush1.msra.mxu0 0.0
        %222 = vmatprep.subr.mxu0 0.0
        %223 = vmatpush1.msra.mxu0 0.0
        %224 = vmatprep.subr.mxu0 0.0
        %225 = vmatpush1.msra.mxu0 0.0
        %226 = vmatprep.subr.mxu0 0.0
        %227 = vmatpush1.msra.mxu0 0.0
        %228 = vmatprep.subr.mxu0 0.0
        %229 = vmatpush1.msra.mxu0 0.0
        %230 = vmatprep.subr.mxu0 0.0
        %231 = vmatpush1.msra.mxu0 0.0
        %232 = vmatprep.subr.mxu0 0.0
        %233 = vmatpush1.msra.mxu0 0.0
        %234 = vmatprep.subr.mxu0 0.0
        %235 = vmatpush1.msra.mxu0 0.0
        %236 = vmatprep.subr.mxu0 0.0
        %237 = vmatpush1.msra.mxu0 0.0
        %238 = vmatprep.subr.mxu0 0.0
        %239 = vmatpush1.msra.mxu0 0.0
        %240 = vmatprep.subr.mxu0 0.0
        %241 = vmatpush1.msra.mxu0 0.0
        %242 = vmatprep.subr.mxu0 0.0
        %243 = vmatpush1.msra.mxu0 0.0
        %244 = vmatprep.subr.mxu0 0.0
        %245 = vmatpush1.msra.mxu0 0.0
        %246 = vmatprep.subr.mxu0 0.0
        %247 = vmatpush1.msra.mxu0 0.0
        %248 = vmatprep.subr.mxu0 0.0
        %249 = vmatpush1.msra.mxu0 0.0
        %250 = vmatprep.subr.mxu0 0.0
        %251 = vmatpush1.msra.mxu0 0.0
        %252 = vmatprep.subr.mxu0 0.0
        %253 = vmatpush1.msra.mxu0 0.0
        %254 = vmatprep.subr.mxu0 0.0
        %255 = vmatpush1.msra.mxu0 0.0
        %256 = vmatprep.subr.mxu0 0.0
        %257 = vmatpush1.msra.mxu0 0.0
        %258 = vmatprep.subr.mxu0 0.0
        %259 = vmatpush1.msra.mxu0 0.0
        %260 = vmatprep.subr.mxu0 0.0
        %261 = vmatpush1.msra.mxu0 0.0
        %262 = vmatprep.subr.mxu0 0.0
        %263 = vmatpush1.msra.mxu0 0.0
        %264 = vmatprep.subr.mxu0 0.0
        %265 = vmatpush1.msra.mxu0 0.0
        %266 = vmatprep.subr.mxu0 0.0
        %267 = vmatpush1.msra.mxu0 0.0
        %268 = vmatprep.subr.mxu0 0.0
        %269 = vmatpush1.msra.mxu0 0.0
        %270 = vmatprep.subr.mxu0 0.0
        %271 = vmatpush1.msra.mxu0 0.0
        %272 = vmatprep.subr.mxu0 0.0
        %273 = vmatpush1.msra.mxu0 0.0
        %274 = vmatprep.subr.mxu0 0.0
        %275 = vmatpush1.msra.mxu0 0.0
        %276 = vmatprep.mubr.f32.mxu0 0.0
        %277 = vmatmul.mubr.f32.gmra.mrb[0].mxu0 %v210
        %v278 = vpop.f32.mrb[0].mxu0
        %v279 = vadd.f32 %v207, %v278
        %v280 = vpop.f32.mrb[0].mxu0
        %281 = vdwg.mxu0
        %v282 = vmul.f32 %v205, %v279
        %v283 = vmax.f32 %v282, 0.0
        %vm284 = vcmask 23552
        %v285 = vsel %vm284, %v283, 0.0
        %v286 = vrot.slane %v285, 4
        %v287 = vadd.f32 %v285, %v286
        %v288 = vrot.slane %v287, 2
        %v289 = vadd.f32 %v287, %v288
        %v290 = vrot.slane %v289, 1
        %v291 = vadd.f32 %v289, %v290
        %vm292 = vcmask 16384
        %293 = vst.msk [vmem:[%s186] sm:$0x1] %vm292, %v291
        %s294 = sand.u32 %s103, 1
        %s295 = scalar_lea.sflag [#allocation3], %s294
        %s296 = sand.u32 %s103, 1
        %s297 = scalar_lea.vmem [#allocation2], %s296
        // Predicated region
        $region33: #{tpu_custom_call.1} parent=31 // pred_check
          %p298 = pneg %p113
        $region34: #{tpu_custom_call.1} parent=31 // pred_check_branch
          %300 = sbr.rel (%p298) target = $region36
        $region35: #{tpu_custom_call.1} parent=31 // pred_region
          %s302 = ssub.s32 16, 16
          %303 = vsyncadd %s295, %s302
          %s304 = smul.addr %s17, 16
          %s305 = scalar_lea.hbm %s3, %s304
          %s307 = sshll.u32 %s297, 4
          %s308 = int_to_ptr.vmem [resolvable:$true] %s307
          %310 = dma.vmem_to_hbm [thread:$0]  %s308, 16, %s305, %s295
        $region36: #{tpu_custom_call.1} parent=31 // pred_fallthru
          _
      $region32: #{tpu_custom_call.1} parent=5 // pred_fallthru
        _
      %p311 = scmp.le.s32.totalorder 2, %s12
      // Predicated region
      $region37: #{tpu_custom_call.1} parent=5 // pred_check
        %p312 = pneg %p311
      $region38: #{tpu_custom_call.1} parent=5 // pred_check_branch
        %314 = sbr.rel (%p312) target = $region40
      $region39: #{tpu_custom_call.1} parent=5 // pred_region
        %s315 = ssub.s32 %s12, 2
        // Predicated region
        $region41: #{tpu_custom_call.1} parent=39 // pred_check
          %p316 = pneg %p119
        $region42: #{tpu_custom_call.1} parent=39 // pred_check_branch
          %318 = sbr.rel (%p316) target = $region44
        $region43: #{tpu_custom_call.1} parent=39 // pred_region
          %s319 = sand.u32 %s104, 1
          %s320 = scalar_lea.sflag [#allocation3], %s319
          %s321 = sand.u32 %s104, 1
          %s322 = scalar_lea.vmem [#allocation2], %s321
          %323 = dma.done %s320, 16
        $region44: #{tpu_custom_call.1} parent=39 // pred_fallthru
          _
      $region40: #{tpu_custom_call.1} parent=5 // pred_fallthru
        _
    $region6: #{tpu_custom_call.1} parent=1 // loop_footer
      %s16 = sadd.s32 1, %s12
    $region7: #{tpu_custom_call.1} parent=1 // loop_footer_branch
      %11 = sbr.rel target = $region3
    $region8: #{tpu_custom_call.1} parent=1 // loop_exit
      _
    %324 = vsyncpa [#allocation3], 1
    %s325 = scalar_lea.sflag [#allocation3], 1
    %326 = vsyncpa %s325, 1

</llo_original>
